<compile_context>
chip_gen: v7x
topology: tpu7x:2x2x1
jax: 0.10.0
libtpu: 0.0.40
codegen_flags: <defaults>
</compile_context>

<pallas_src>
import functools

import jax
import jax.numpy as jnp
from jax.experimental import pallas as pl
from jax.experimental.pallas import tpu as pltpu


def _round_up(x, m):
    return (x + m - 1) // m * m


# ----------------------------- Pallas kernel --------------------------------

def _sa_conv_kernel(x_ref, w1_ref, b1_ref, w2_ref, b2_ref, o_ref, *, k):
    # x_ref : (tile_m * k, Cin_pad)  neighbor rows, query-major / neighbor-minor
    # w1/b1 : (Cin_pad, H1_pad), (1, H1_pad)   conv1x1 weight with BN folded in
    # w2/b2 : (H1_pad, H2_pad), (1, H2_pad)
    # o_ref : (tile_m, H2_pad)       max over the k neighbors of each query
    x = x_ref[...]
    # Layer 1: single tall MXU matmul over all tile_m*k rows, bias + ReLU.
    h = jnp.dot(x, w1_ref[...], preferred_element_type=jnp.float32)
    h = jnp.maximum(h + b1_ref[...], 0.0)
    # Layer 2.
    g = jnp.dot(h, w2_ref[...], preferred_element_type=jnp.float32)
    g = jnp.maximum(g + b2_ref[...], 0.0)
    # Max-pool over the k neighbors of each query.  k % 8 == 0 and H2_pad is a
    # multiple of 128, so this reshape is layout-preserving (no data movement)
    # and the reduction is a sublane max on the XLU.
    rows, h2 = g.shape
    g = g.reshape(rows // k, k, h2)
    o_ref[...] = jnp.max(g, axis=1).astype(o_ref.dtype)


def sa_conv_local_mlp_max(x_rows, w1, b1, w2, b2, *, k, tile_m):
    """x_rows: (BM_pad*k, Cin_pad) -> (BM_pad, H2_pad): local MLP + max over k."""
    total_rows, cin = x_rows.shape
    bm_pad = total_rows // k
    h1 = w1.shape[1]
    h2 = w2.shape[1]
    assert bm_pad % tile_m == 0 and tile_m % 8 == 0 and k % 8 == 0

    flops = int(2 * total_rows * (cin * h1 + h1 * h2))
    bytes_accessed = int(
        (x_rows.size + w1.size + b1.size + w2.size + b2.size + bm_pad * h2) * 4)

    return pl.pallas_call(
        functools.partial(_sa_conv_kernel, k=k),
        out_shape=jax.ShapeDtypeStruct((bm_pad, h2), jnp.float32),
        grid_spec=pltpu.PrefetchScalarGridSpec(
            num_scalar_prefetch=0,
            grid=(bm_pad // tile_m,),
            in_specs=[
                pl.BlockSpec((tile_m * k, cin), lambda i: (i, 0)),
                pl.BlockSpec((cin, h1), lambda i: (0, 0)),
                pl.BlockSpec((1, h1), lambda i: (0, 0)),
                pl.BlockSpec((h1, h2), lambda i: (0, 0)),
                pl.BlockSpec((1, h2), lambda i: (0, 0)),
            ],
            out_specs=pl.BlockSpec((tile_m, h2), lambda i: (i, 0)),
        ),
        compiler_params=pltpu.CompilerParams(
            dimension_semantics=("parallel",),
            vmem_limit_bytes=48 * 1024 * 1024),
        cost_estimate=pl.CostEstimate(
            flops=flops, transcendentals=0, bytes_accessed=bytes_accessed),
    )(x_rows, w1, b1, w2, b2)


# -------------------------------- JAX glue -----------------------------------

def group_gather(feats_t, idx):
    """feats_t: (B, N, C), idx: (B, M, K) -> (B, M, K, C)."""
    b = jnp.arange(feats_t.shape[0])[:, None, None]
    return feats_t[b, idx]


def sa_conv_forward(q_points, s_points, s_feats, neighbor_indices, params,
                    *, tile_m_max=512):
    """Matches SAConv.forward.

    q_points: (B, 3, M), s_points: (B, 3, N), s_feats: (B, Ci, N),
    neighbor_indices: (B, M, K).  Returns q_feats: (B, C_out, M).
    """
    w1, b1, w2, b2 = params                   # unpadded BN-folded weights
    B, _, M = q_points.shape
    Ci = s_feats.shape[1]
    Cin = Ci + 3
    K = neighbor_indices.shape[-1]
    H1, H2 = w1.shape[1], w2.shape[1]

    # ---- padded sizes for sublane/lane alignment ----
    cin_pad = _round_up(Cin, 8)
    h1_pad = _round_up(H1, 128)
    h2_pad = _round_up(H2, 128)
    k_pad = _round_up(K, 8)

    # Duplicate a neighbor column if K is not a multiple of 8 (max-neutral).
    if k_pad != K:
        extra = jnp.broadcast_to(neighbor_indices[..., :1], (B, M, k_pad - K))
        neighbor_indices = jnp.concatenate([neighbor_indices, extra], axis=-1)

    # ---- single gather from a [feats | points | 0-pad] table, then subtract
    #      the query point from the point columns to get relative offsets ----
    s_feats_t = jnp.transpose(s_feats, (0, 2, 1))      # (B, N, Ci)
    s_points_t = jnp.transpose(s_points, (0, 2, 1))    # (B, N, 3)
    q_points_t = jnp.transpose(q_points, (0, 2, 1))    # (B, M, 3)
    N = s_points_t.shape[1]
    combined = jnp.concatenate(
        [s_feats_t, s_points_t,
         jnp.zeros((B, N, cin_pad - Cin), jnp.float32)], axis=-1)   # (B,N,cin_pad)
    gathered = group_gather(combined, neighbor_indices)             # (B,M,k_pad,cin_pad)
    q_sub = jnp.concatenate(
        [jnp.zeros((B, M, Ci), jnp.float32), q_points_t,
         jnp.zeros((B, M, cin_pad - Cin), jnp.float32)], axis=-1)   # (B,M,cin_pad)
    x = gathered - q_sub[:, :, None, :]        # feats | (points - q) | 0-pad

    # ---- pad the B*M query axis and flatten to contiguous rows ----
    BM = B * M
    tile_m = min(tile_m_max, _round_up(BM, 8))
    bm_pad = _round_up(BM, tile_m)
    x = x.reshape(BM, k_pad, cin_pad)
    if bm_pad != BM:
        x = jnp.concatenate(
            [x, jnp.zeros((bm_pad - BM, k_pad, cin_pad), jnp.float32)], axis=0)
    x_rows = x.reshape(bm_pad * k_pad, cin_pad)

    # ---- zero-pad weights (keeps the math identical) ----
    w1p = jnp.zeros((cin_pad, h1_pad), jnp.float32).at[:Cin, :H1].set(w1)
    b1p = jnp.zeros((1, h1_pad), jnp.float32).at[:, :H1].set(b1)
    w2p = jnp.zeros((h1_pad, h2_pad), jnp.float32).at[:H1, :H2].set(w2)
    b2p = jnp.zeros((1, h2_pad), jnp.float32).at[:, :H2].set(b2)

    out = sa_conv_local_mlp_max(x_rows, w1p, b1p, w2p, b2p,
                                k=k_pad, tile_m=tile_m)     # (bm_pad, h2_pad)
    out = out[:BM, :H2].reshape(B, M, H2)
    return jnp.transpose(out, (0, 2, 1))                    # (B, C_out, M)


# ----------------------- deterministic parameter setup -----------------------

def make_layer_params(key, cin, cout):
    """Conv2d(1x1, bias=False) + BatchNorm2d (eval) folded into (W_eff, b_eff)."""
    kw, kg, kb, km, kv = jax.random.split(key, 5)
    w = 0.1 * jax.random.normal(kw, (cin, cout), jnp.float32)
    gamma = 1.0 + 0.1 * jax.random.normal(kg, (cout,), jnp.float32)
    beta = 0.1 * jax.random.normal(kb, (cout,), jnp.float32)
    mean = 0.1 * jax.random.normal(km, (cout,), jnp.float32)
    var = jnp.abs(jax.random.normal(kv, (cout,), jnp.float32)) + 0.5
    eps = 1e-5
    scale = gamma / jnp.sqrt(var + eps)
    w_eff = w * scale[None, :]
    b_eff = (beta - mean * scale)[None, :]     # (1, cout)
    return w_eff, b_eff


def reference_mlp_max(x_flat, w1, b1, w2, b2):
    h = jnp.maximum(jnp.einsum('mkc,ch->mkh', x_flat, w1) + b1[None], 0.0)
    g = jnp.maximum(jnp.einsum('mkh,hg->mkg', h, w2) + b2[None], 0.0)
    return jnp.max(g, axis=1)


# ----------------------------------- main ------------------------------------

if __name__ == "__main__":
    B, Ci, M, N, K = 2, 4, 16, 32, 8
    output_dims = (16, 32)
    Cin = Ci + 3                      # module input_dim = C_i + 3 (offsets)

    root = jax.random.PRNGKey(0)
    kq, ks, kf, ki, kp1, kp2 = jax.random.split(root, 6)

    q_points = jax.random.normal(kq, (B, 3, M), jnp.float32)
    s_points = jax.random.normal(ks, (B, 3, N), jnp.float32)
    s_feats = jax.random.normal(kf, (B, Ci, N), jnp.float32)
    neighbor_indices = jax.random.randint(ki, (B, M, K), 0, N)

    w1, b1 = make_layer_params(kp1, Cin, output_dims[0])
    w2, b2 = make_layer_params(kp2, output_dims[0], output_dims[1])
    params = (w1, b1, w2, b2)

    q_feats = sa_conv_forward(q_points, s_points, s_feats,
                              neighbor_indices, params)
    q_feats = jax.block_until_ready(q_feats)
    assert q_feats.shape == (B, output_dims[-1], M)

    # correctness check against a pure-JAX reference of the full hot path
    s_feats_t = jnp.transpose(s_feats, (0, 2, 1))
    s_points_t = jnp.transpose(s_points, (0, 2, 1))
    q_points_t = jnp.transpose(q_points, (0, 2, 1))
    nbr_pts = group_gather(s_points_t, neighbor_indices)
    nbr_off = nbr_pts - q_points_t[:, :, None, :]
    nbr_fts = group_gather(s_feats_t, neighbor_indices)
    feats = jnp.concatenate([nbr_fts, nbr_off], axis=-1)
    ref = reference_mlp_max(feats.reshape(B * M, K, Cin), w1, b1, w2, b2)
    ref = jnp.transpose(ref.reshape(B, M, -1), (0, 2, 1))

    assert jnp.allclose(q_feats, ref, rtol=1e-3, atol=1e-3), \
        float(jnp.max(jnp.abs(q_feats - ref)))

    print("KERNEL_OK")
</pallas_src>

<mosaic_0001>
module attributes {stable_mosaic.version = 11 : i64} {
  func.func @_sa_conv_kernel(%arg0: i32, %arg1: memref<256x8xf32, #tpu.memory_space<vmem>>, %arg2: memref<8x128xf32, #tpu.memory_space<vmem>>, %arg3: memref<1x128xf32, #tpu.memory_space<vmem>>, %arg4: memref<128x128xf32, #tpu.memory_space<vmem>>, %arg5: memref<1x128xf32, #tpu.memory_space<vmem>>, %arg6: memref<32x128xf32, #tpu.memory_space<vmem>>) attributes {dimension_semantics = [#tpu.dimension_semantics<parallel>], iteration_bounds = array<i64: 1>, scalar_prefetch = 0 : i64, scratch_operands = 0 : i64, tpu.core_type = #tpu.core_type<tc>, window_params = [{transform_indices = @transform_0, window_bounds = array<i64: 256, 8>}, {pipeline_mode = #tpu.pipeline_mode<synchronous>, transform_indices = @transform_1, window_bounds = array<i64: 8, 128>}, {pipeline_mode = #tpu.pipeline_mode<synchronous>, transform_indices = @transform_2, window_bounds = array<i64: 1, 128>}, {pipeline_mode = #tpu.pipeline_mode<synchronous>, transform_indices = @transform_3, window_bounds = array<i64: 128, 128>}, {pipeline_mode = #tpu.pipeline_mode<synchronous>, transform_indices = @transform_4, window_bounds = array<i64: 1, 128>}, {transform_indices = @transform_5, window_bounds = array<i64: 32, 128>}]} {
    %c0 = arith.constant 0 : index
    %c0_0 = arith.constant 0 : index
    %0 = vector.load %arg1[%c0, %c0_0] : memref<256x8xf32, #tpu.memory_space<vmem>>, vector<256x8xf32>
    %c0_1 = arith.constant 0 : index
    %c0_2 = arith.constant 0 : index
    %1 = vector.load %arg2[%c0_1, %c0_2] : memref<8x128xf32, #tpu.memory_space<vmem>>, vector<8x128xf32>
    %cst = arith.constant dense<0.000000e+00> : vector<256x128xf32>
    %2 = tpu.matmul %0, %1, %cst {dimension_numbers = #tpu.dot_dimension_numbers<[1], [0], [0], [1], [0, 0, 1, 1], [], []>} : vector<256x8xf32>, vector<8x128xf32>, vector<256x128xf32> -> vector<256x128xf32>
    %c0_3 = arith.constant 0 : index
    %c0_4 = arith.constant 0 : index
    %3 = vector.load %arg3[%c0_3, %c0_4] : memref<1x128xf32, #tpu.memory_space<vmem>>, vector<1x128xf32>
    %4 = vector.broadcast %3 : vector<1x128xf32> to vector<256x128xf32>
    %5 = arith.addf %2, %4 : vector<256x128xf32>
    %cst_5 = arith.constant 0.000000e+00 : f32
    %6 = vector.broadcast %cst_5 : f32 to vector<256x128xf32>
    %7 = arith.maximumf %5, %6 : vector<256x128xf32>
    %c0_6 = arith.constant 0 : index
    %c0_7 = arith.constant 0 : index
    %8 = vector.load %arg4[%c0_6, %c0_7] : memref<128x128xf32, #tpu.memory_space<vmem>>, vector<128x128xf32>
    %cst_8 = arith.constant dense<0.000000e+00> : vector<256x128xf32>
    %9 = tpu.matmul %7, %8, %cst_8 {dimension_numbers = #tpu.dot_dimension_numbers<[1], [0], [0], [1], [0, 0, 1, 1], [], []>} : vector<256x128xf32>, vector<128x128xf32>, vector<256x128xf32> -> vector<256x128xf32>
    %c0_9 = arith.constant 0 : index
    %c0_10 = arith.constant 0 : index
    %10 = vector.load %arg5[%c0_9, %c0_10] : memref<1x128xf32, #tpu.memory_space<vmem>>, vector<1x128xf32>
    %11 = vector.broadcast %10 : vector<1x128xf32> to vector<256x128xf32>
    %12 = arith.addf %9, %11 : vector<256x128xf32>
    %cst_11 = arith.constant 0.000000e+00 : f32
    %13 = vector.broadcast %cst_11 : f32 to vector<256x128xf32>
    %14 = arith.maximumf %12, %13 : vector<256x128xf32>
    %15 = vector.shape_cast %14 : vector<256x128xf32> to vector<32x8x128xf32>
    %cst_12 = arith.constant dense<0xFF800000> : vector<32x128xf32>
    %16 = vector.multi_reduction <maximumf>, %15, %cst_12 [1] : vector<32x8x128xf32> to vector<32x128xf32>
    %c0_13 = arith.constant 0 : index
    %c0_14 = arith.constant 0 : index
    %17 = vector.load %arg6[%c0_13, %c0_14] : memref<32x128xf32, #tpu.memory_space<vmem>>, vector<32x128xf32>
    tpu.vector_store %arg6[%c0_13, %c0_14], %16 {strides = array<i32>} : memref<32x128xf32, #tpu.memory_space<vmem>>, vector<32x128xf32>,
    return
  }
  func.func @transform_0(%arg0: i32) -> (i32, i32) {
    %c0_i32 = arith.constant 0 : i32
    %c0_i32_0 = arith.constant 0 : i32
    return %arg0, %c0_i32 : i32, i32
  }
  func.func @transform_1(%arg0: i32) -> (i32, i32) {
    %c0_i32 = arith.constant 0 : i32
    %c0_i32_0 = arith.constant 0 : i32
    %c0_i32_1 = arith.constant 0 : i32
    return %c0_i32, %c0_i32_0 : i32, i32
  }
  func.func @transform_2(%arg0: i32) -> (i32, i32) {
    %c0_i32 = arith.constant 0 : i32
    %c0_i32_0 = arith.constant 0 : i32
    %c0_i32_1 = arith.constant 0 : i32
    return %c0_i32, %c0_i32_0 : i32, i32
  }
  func.func @transform_3(%arg0: i32) -> (i32, i32) {
    %c0_i32 = arith.constant 0 : i32
    %c0_i32_0 = arith.constant 0 : i32
    %c0_i32_1 = arith.constant 0 : i32
    return %c0_i32, %c0_i32_0 : i32, i32
  }
  func.func @transform_4(%arg0: i32) -> (i32, i32) {
    %c0_i32 = arith.constant 0 : i32
    %c0_i32_0 = arith.constant 0 : i32
    %c0_i32_1 = arith.constant 0 : i32
    return %c0_i32, %c0_i32_0 : i32, i32
  }
  func.func @transform_5(%arg0: i32) -> (i32, i32) {
    %c0_i32 = arith.constant 0 : i32
    %c0_i32_0 = arith.constant 0 : i32
    return %arg0, %c0_i32 : i32, i32
  }
}

</mosaic_0001>

<llo_original>
// kernel: tpu_custom_call.1
$region0: #{tpu_custom_call.1}
  #allocation0 [shape = 'u32[]', space=smem, size = 0x4, offset = 0x4, fixed_abs, tag = 'smem constant byte address 0x4 - core index']
  #allocation1 [shape = 'u32[144,128]{1,0:T(1,128)}', space=vmem, size = 0x12000, scoped, tag = 'internal scratch']
  %s0 = inlined_call_operand.vmem [shape: f32[256,8], index: 0, kind: input, shape index: {}]
  %s1 = inlined_call_operand.vmem [shape: f32[8,128], index: 1, kind: input, shape index: {}]
  %s2 = inlined_call_operand.vmem [shape: f32[1,128], index: 2, kind: input, shape index: {}]
  %s3 = inlined_call_operand.vmem [shape: f32[128,128], index: 3, kind: input, shape index: {}]
  %s4 = inlined_call_operand.vmem [shape: f32[1,128], index: 4, kind: input, shape index: {}]
  %s5 = inlined_call_operand.hbm [shape: f32[32,128], index: 5, kind: output, shape index: {}]
  %s6 = sld [smem:[#allocation0]]
  $region30: #{tpu_custom_call.1} parent=0
    _
  %s8 = ssub.s32 1, %s6
  %s9 = scalar_select 0, %s8, %s6
  $region1: #{tpu_custom_call.1} parent=0
    #allocation2 [shape = 'u8[16384]{0}', space=vmem, size = 0x4000, scoped, tag = 'output window, operand 0, single buffered']
    #allocation3 [shape = 's32[1]{0}', space=sflag, size = 0x4, scoped, tag = 'scoped memory for tpu_custom_call.1']
    %10 = vsyncpa [#allocation3], 0
    // Predicated region
    $region2: #{tpu_custom_call.1} parent=1 // pred_check
      _
    $region3: #{tpu_custom_call.1} parent=1 // pred_check_branch
      %12 = sbr.rel (0) target = $region5
    $region4: #{tpu_custom_call.1} parent=1 // pred_region
      _
    $region5: #{tpu_custom_call.1} parent=1 // pred_fallthru
      _
    // Predicated region
    $region6: #{tpu_custom_call.1} parent=1 // pred_check
      _
    $region7: #{tpu_custom_call.1} parent=1 // pred_check_branch
      %14 = sbr.rel (0) target = $region9
    $region8: #{tpu_custom_call.1} parent=1 // pred_region
      _
    $region9: #{tpu_custom_call.1} parent=1 // pred_fallthru
      _
    // Predicated region
    $region10: #{tpu_custom_call.1} parent=1 // pred_check
      _
    $region11: #{tpu_custom_call.1} parent=1 // pred_check_branch
      %16 = sbr.rel (0) target = $region13
    $region12: #{tpu_custom_call.1} parent=1 // pred_region
      _
    $region13: #{tpu_custom_call.1} parent=1 // pred_fallthru
      _
    // Predicated region
    $region14: #{tpu_custom_call.1} parent=1 // pred_check
      _
    $region15: #{tpu_custom_call.1} parent=1 // pred_check_branch
      %18 = sbr.rel (0) target = $region17
    $region16: #{tpu_custom_call.1} parent=1 // pred_region
      _
    $region17: #{tpu_custom_call.1} parent=1 // pred_fallthru
      _
    // Predicated region
    $region18: #{tpu_custom_call.1} parent=1 // pred_check
      _
    $region19: #{tpu_custom_call.1} parent=1 // pred_check_branch
      %20 = sbr.rel (0) target = $region21
    $region20: #{tpu_custom_call.1} parent=1 // pred_region
      _
    $region21: #{tpu_custom_call.1} parent=1 // pred_fallthru
      _
    %v21 = vld [vmem:[%s0] sm:$0xff]
    %v22 = vld [vmem:[%s0 + $0x8] sm:$0xff]
    %v23 = vld [vmem:[%s0 + $0x10] sm:$0xff]
    %v24 = vld [vmem:[%s0 + $0x18] sm:$0xff]
    %v25 = vld [vmem:[%s0 + $0x20] sm:$0xff]
    %v26 = vld [vmem:[%s0 + $0x28] sm:$0xff]
    %v27 = vld [vmem:[%s0 + $0x30] sm:$0xff]
    %v28 = vld [vmem:[%s0 + $0x38] sm:$0xff]
    %v29 = vld [vmem:[%s0 + $0x40] sm:$0xff]
    %v30 = vld [vmem:[%s0 + $0x48] sm:$0xff]
    %v31 = vld [vmem:[%s0 + $0x50] sm:$0xff]
    %v32 = vld [vmem:[%s0 + $0x58] sm:$0xff]
    %v33 = vld [vmem:[%s0 + $0x60] sm:$0xff]
    %v34 = vld [vmem:[%s0 + $0x68] sm:$0xff]
    %v35 = vld [vmem:[%s0 + $0x70] sm:$0xff]
    %v36 = vld [vmem:[%s0 + $0x78] sm:$0xff]
    %v37 = vld [vmem:[%s0 + $0x80] sm:$0xff]
    %v38 = vld [vmem:[%s0 + $0x88] sm:$0xff]
    %v39 = vld [vmem:[%s0 + $0x90] sm:$0xff]
    %v40 = vld [vmem:[%s0 + $0x98] sm:$0xff]
    %v41 = vld [vmem:[%s0 + $0xa0] sm:$0xff]
    %v42 = vld [vmem:[%s0 + $0xa8] sm:$0xff]
    %v43 = vld [vmem:[%s0 + $0xb0] sm:$0xff]
    %v44 = vld [vmem:[%s0 + $0xb8] sm:$0xff]
    %v45 = vld [vmem:[%s0 + $0xc0] sm:$0xff]
    %v46 = vld [vmem:[%s0 + $0xc8] sm:$0xff]
    %v47 = vld [vmem:[%s0 + $0xd0] sm:$0xff]
    %v48 = vld [vmem:[%s0 + $0xd8] sm:$0xff]
    %v49 = vld [vmem:[%s0 + $0xe0] sm:$0xff]
    %v50 = vld [vmem:[%s0 + $0xe8] sm:$0xff]
    %v51 = vld [vmem:[%s0 + $0xf0] sm:$0xff]
    %v52 = vld [vmem:[%s0 + $0xf8] sm:$0xff]
    %v53 = vld [vmem:[%s1] sm:$0xff]
    %v54 = vld [vmem:[%s2] sm:$0x1]
    %v56 = vlaneseq
    %v57 = vshrl.u32 %v56, 7
    %v58 = vsub.s32 0, %v57
    %v59 = vrot.slane %v54, %v58
    %vm61 = vcmask 64512
    %v63 = vsel %vm61, %v21, 0
    %v66 = vsel %vm61, %v22, 0
    %v69 = vsel %vm61, %v23, 0
    %v72 = vsel %vm61, %v24, 0
    %v75 = vsel %vm61, %v25, 0
    %v78 = vsel %vm61, %v26, 0
    %v81 = vsel %vm61, %v27, 0
    %v84 = vsel %vm61, %v28, 0
    %v87 = vsel %vm61, %v29, 0
    %v90 = vsel %vm61, %v30, 0
    %v93 = vsel %vm61, %v31, 0
    %v96 = vsel %vm61, %v32, 0
    %v99 = vsel %vm61, %v33, 0
    %v102 = vsel %vm61, %v34, 0
    %v105 = vsel %vm61, %v35, 0
    %v108 = vsel %vm61, %v36, 0
    %v111 = vsel %vm61, %v37, 0
    %v114 = vsel %vm61, %v38, 0
    %v117 = vsel %vm61, %v39, 0
    %v120 = vsel %vm61, %v40, 0
    %v123 = vsel %vm61, %v41, 0
    %v126 = vsel %vm61, %v42, 0
    %v129 = vsel %vm61, %v43, 0
    %v132 = vsel %vm61, %v44, 0
    %v135 = vsel %vm61, %v45, 0
    %v138 = vsel %vm61, %v46, 0
    %v141 = vsel %vm61, %v47, 0
    %v144 = vsel %vm61, %v48, 0
    %v147 = vsel %vm61, %v49, 0
    %v150 = vsel %vm61, %v50, 0
    %v153 = vsel %vm61, %v51, 0
    %v156 = vsel %vm61, %v52, 0
    %158 = vmatprep.subr.mxu0 0.0
    %159 = vmatpush1.msra.mxu0 %v53
    %160 = vmatprep.subr.mxu0 0.0
    %161 = vmatpush1.msra.mxu0 0.0
    %162 = vmatprep.subr.mxu0 0.0
    %163 = vmatpush1.msra.mxu0 0.0
    %164 = vmatprep.subr.mxu0 0.0
    %165 = vmatpush1.msra.mxu0 0.0
    %166 = vmatprep.subr.mxu0 0.0
    %167 = vmatpush1.msra.mxu0 0.0
    %168 = vmatprep.subr.mxu0 0.0
    %169 = vmatpush1.msra.mxu0 0.0
    %170 = vmatprep.subr.mxu0 0.0
    %171 = vmatpush1.msra.mxu0 0.0
    %172 = vmatprep.subr.mxu0 0.0
    %173 = vmatpush1.msra.mxu0 0.0
    %174 = vmatprep.subr.mxu0 0.0
    %175 = vmatpush1.msra.mxu0 0.0
    %176 = vmatprep.subr.mxu0 0.0
    %177 = vmatpush1.msra.mxu0 0.0
    %178 = vmatprep.subr.mxu0 0.0
    %179 = vmatpush1.msra.mxu0 0.0
    %180 = vmatprep.subr.mxu0 0.0
    %181 = vmatpush1.msra.mxu0 0.0
    %182 = vmatprep.subr.mxu0 0.0
    %183 = vmatpush1.msra.mxu0 0.0
    %184 = vmatprep.subr.mxu0 0.0
    %185 = vmatpush1.msra.mxu0 0.0
    %186 = vmatprep.subr.mxu0 0.0
    %187 = vmatpush1.msra.mxu0 0.0
    %188 = vmatprep.subr.mxu0 0.0
    %189 = vmatpush1.msra.mxu0 0.0
    %190 = vmatprep.subr.mxu0 0.0
    %191 = vmatpush1.msra.mxu0 0.0
    %192 = vmatprep.subr.mxu0 0.0
    %193 = vmatpush1.msra.mxu0 0.0
    %194 = vmatprep.subr.mxu0 0.0
    %195 = vmatpush1.msra.mxu0 0.0
    %196 = vmatprep.subr.mxu0 0.0
    %197 = vmatpush1.msra.mxu0 0.0
    %198 = vmatprep.subr.mxu0 0.0
    %199 = vmatpush1.msra.mxu0 0.0
    %200 = vmatprep.subr.mxu0 0.0
    %201 = vmatpush1.msra.mxu0 0.0
    %202 = vmatprep.subr.mxu0 0.0
    %203 = vmatpush1.msra.mxu0 0.0
    %204 = vmatprep.subr.mxu0 0.0
    %205 = vmatpush1.msra.mxu0 0.0
    %206 = vmatprep.subr.mxu0 0.0
    %207 = vmatpush1.msra.mxu0 0.0
    %208 = vmatprep.subr.mxu0 0.0
    %209 = vmatpush1.msra.mxu0 0.0
    %210 = vmatprep.subr.mxu0 0.0
    %211 = vmatpush1.msra.mxu0 0.0
    %212 = vmatprep.subr.mxu0 0.0
    %213 = vmatpush1.msra.mxu0 0.0
    %214 = vmatprep.subr.mxu0 0.0
    %215 = vmatpush1.msra.mxu0 0.0
    %216 = vmatprep.subr.mxu0 0.0
    %217 = vmatpush1.msra.mxu0 0.0
    %218 = vmatprep.subr.mxu0 0.0
    %219 = vmatpush1.msra.mxu0 0.0
    %220 = vmatprep.subr.mxu0 0.0
    %221 = vmatpush1.msra.mxu0 0.0
    %222 = vmatprep.mubr.f32.mxu0 0.0
    %223 = vmatmul.mubr.f32.gmra.mrb[0].mxu0 %v63
    %v224 = vpop.f32.mrb[0].mxu0
    %v225 = vadd.f32 %v59, %v224
    %v226 = vpop.f32.mrb[0].mxu0
    %227 = vmatprep.mubr.f32.mxu0 0.0
    %228 = vmatmul.mubr.f32.gmra.mrb[0].mxu0 %v66
    %v229 = vpop.f32.mrb[0].mxu0
    %v230 = vadd.f32 %v59, %v229
    %v231 = vpop.f32.mrb[0].mxu0
    %232 = vmatprep.mubr.f32.mxu0 0.0
    %233 = vmatmul.mubr.f32.gmra.mrb[0].mxu0 %v69
    %v234 = vpop.f32.mrb[0].mxu0
    %v235 = vadd.f32 %v59, %v234
    %v236 = vpop.f32.mrb[0].mxu0
    %237 = vmatprep.mubr.f32.mxu0 0.0
    %238 = vmatmul.mubr.f32.gmra.mrb[0].mxu0 %v72
    %v239 = vpop.f32.mrb[0].mxu0
    %v240 = vadd.f32 %v59, %v239
    %v241 = vpop.f32.mrb[0].mxu0
    %242 = vmatprep.mubr.f32.mxu0 0.0
    %243 = vmatmul.mubr.f32.gmra.mrb[0].mxu0 %v75
    %v244 = vpop.f32.mrb[0].mxu0
    %v245 = vadd.f32 %v59, %v244
    %v246 = vpop.f32.mrb[0].mxu0
    %247 = vmatprep.mubr.f32.mxu0 0.0
    %248 = vmatmul.mubr.f32.gmra.mrb[0].mxu0 %v78
    %v249 = vpop.f32.mrb[0].mxu0
    %v250 = vadd.f32 %v59, %v249
    %v251 = vpop.f32.mrb[0].mxu0
    %252 = vmatprep.mubr.f32.mxu0 0.0
    %253 = vmatmul.mubr.f32.gmra.mrb[0].mxu0 %v81
    %v254 = vpop.f32.mrb[0].mxu0
    %v255 = vadd.f32 %v59, %v254
    %v256 = vpop.f32.mrb[0].mxu0
    %257 = vmatprep.mubr.f32.mxu0 0.0
    %258 = vmatmul.mubr.f32.gmra.mrb[0].mxu0 %v84
    %v259 = vpop.f32.mrb[0].mxu0
    %v260 = vadd.f32 %v59, %v259
    %v261 = vpop.f32.mrb[0].mxu0
    %262 = vmatprep.mubr.f32.mxu0 0.0
    %263 = vmatmul.mubr.f32.gmra.mrb[0].mxu0 %v87
    %v264 = vpop.f32.mrb[0].mxu0
    %v265 = vadd.f32 %v59, %v264
    %v266 = vpop.f32.mrb[0].mxu0
    %267 = vmatprep.mubr.f32.mxu0 0.0
    %268 = vmatmul.mubr.f32.gmra.mrb[0].mxu0 %v90
    %v269 = vpop.f32.mrb[0].mxu0
    %v270 = vadd.f32 %v59, %v269
    %v271 = vpop.f32.mrb[0].mxu0
    %272 = vmatprep.mubr.f32.mxu0 0.0
    %273 = vmatmul.mubr.f32.gmra.mrb[0].mxu0 %v93
    %v274 = vpop.f32.mrb[0].mxu0
    %v275 = vadd.f32 %v59, %v274
    %v276 = vpop.f32.mrb[0].mxu0
    %277 = vmatprep.mubr.f32.mxu0 0.0
    %278 = vmatmul.mubr.f32.gmra.mrb[0].mxu0 %v96
    %v279 = vpop.f32.mrb[0].mxu0
    %v280 = vadd.f32 %v59, %v279
    %v281 = vpop.f32.mrb[0].mxu0
    %282 = vmatprep.mubr.f32.mxu0 0.0
    %283 = vmatmul.mubr.f32.gmra.mrb[0].mxu0 %v99
    %v284 = vpop.f32.mrb[0].mxu0
    %v285 = vadd.f32 %v59, %v284
    %v286 = vpop.f32.mrb[0].mxu0
    %287 = vmatprep.mubr.f32.mxu0 0.0
    %288 = vmatmul.mubr.f32.gmra.mrb[0].mxu0 %v102
    %v289 = vpop.f32.mrb[0].mxu0
    %v290 = vadd.f32 %v59, %v289
    %v291 = vpop.f32.mrb[0].mxu0
    %292 = vmatprep.mubr.f32.mxu0 0.0
    %293 = vmatmul.mubr.f32.gmra.mrb[0].mxu0 %v105
    %v294 = vpop.f32.mrb[0].mxu0
    %v295 = vadd.f32 %v59, %v294
    %v296 = vpop.f32.mrb[0].mxu0
    %297 = vmatprep.mubr.f32.mxu0 0.0
    %298 = vmatmul.mubr.f32.gmra.mrb[0].mxu0 %v108
    %v299 = vpop.f32.mrb[0].mxu0
    %v300 = vadd.f32 %v59, %v299
    %v301 = vpop.f32.mrb[0].mxu0
    %302 = vmatprep.mubr.f32.mxu0 0.0
    %303 = vmatmul.mubr.f32.gmra.mrb[0].mxu0 %v111
    %v304 = vpop.f32.mrb[0].mxu0
    %v305 = vadd.f32 %v59, %v304
    %v306 = vpop.f32.mrb[0].mxu0
    %307 = vmatprep.mubr.f32.mxu0 0.0
    %308 = vmatmul.mubr.f32.gmra.mrb[0].mxu0 %v114
    %v309 = vpop.f32.mrb[0].mxu0
    %v310 = vadd.f32 %v59, %v309
    %v311 = vpop.f32.mrb[0].mxu0
    %312 = vmatprep.mubr.f32.mxu0 0.0
    %313 = vmatmul.mubr.f32.gmra.mrb[0].mxu0 %v117
    %v314 = vpop.f32.mrb[0].mxu0
    %v315 = vadd.f32 %v59, %v314
    %v316 = vpop.f32.mrb[0].mxu0
    %317 = vmatprep.mubr.f32.mxu0 0.0
    %318 = vmatmul.mubr.f32.gmra.mrb[0].mxu0 %v120
    %v319 = vpop.f32.mrb[0].mxu0
    %v320 = vadd.f32 %v59, %v319
    %v321 = vpop.f32.mrb[0].mxu0
    %322 = vmatprep.mubr.f32.mxu0 0.0
    %323 = vmatmul.mubr.f32.gmra.mrb[0].mxu0 %v123
    %v324 = vpop.f32.mrb[0].mxu0
    %v325 = vadd.f32 %v59, %v324
    %v326 = vpop.f32.mrb[0].mxu0
    %327 = vmatprep.mubr.f32.mxu0 0.0
    %328 = vmatmul.mubr.f32.gmra.mrb[0].mxu0 %v126
    %v329 = vpop.f32.mrb[0].mxu0
    %v330 = vadd.f32 %v59, %v329
    %v331 = vpop.f32.mrb[0].mxu0
    %332 = vmatprep.mubr.f32.mxu0 0.0
    %333 = vmatmul.mubr.f32.gmra.mrb[0].mxu0 %v129
    %v334 = vpop.f32.mrb[0].mxu0
    %v335 = vadd.f32 %v59, %v334
    %v336 = vpop.f32.mrb[0].mxu0
    %337 = vmatprep.mubr.f32.mxu0 0.0
    %338 = vmatmul.mubr.f32.gmra.mrb[0].mxu0 %v132
    %v339 = vpop.f32.mrb[0].mxu0
    %v340 = vadd.f32 %v59, %v339
    %v341 = vpop.f32.mrb[0].mxu0
    %342 = vmatprep.mubr.f32.mxu0 0.0
    %343 = vmatmul.mubr.f32.gmra.mrb[0].mxu0 %v135
    %v344 = vpop.f32.mrb[0].mxu0
    %v345 = vadd.f32 %v59, %v344
    %v346 = vpop.f32.mrb[0].mxu0
    %347 = vmatprep.mubr.f32.mxu0 0.0
    %348 = vmatmul.mubr.f32.gmra.mrb[0].mxu0 %v138
    %v349 = vpop.f32.mrb[0].mxu0
    %v350 = vadd.f32 %v59, %v349
    %v351 = vpop.f32.mrb[0].mxu0
    %352 = vmatprep.mubr.f32.mxu0 0.0
    %353 = vmatmul.mubr.f32.gmra.mrb[0].mxu0 %v141
    %v354 = vpop.f32.mrb[0].mxu0
    %v355 = vadd.f32 %v59, %v354
    %v356 = vpop.f32.mrb[0].mxu0
    %357 = vmatprep.mubr.f32.mxu0 0.0
    %358 = vmatmul.mubr.f32.gmra.mrb[0].mxu0 %v144
    %v359 = vpop.f32.mrb[0].mxu0
    %v360 = vadd.f32 %v59, %v359
    %v361 = vpop.f32.mrb[0].mxu0
    %362 = vmatprep.mubr.f32.mxu0 0.0
    %363 = vmatmul.mubr.f32.gmra.mrb[0].mxu0 %v147
    %v364 = vpop.f32.mrb[0].mxu0
    %v365 = vadd.f32 %v59, %v364
    %v366 = vpop.f32.mrb[0].mxu0
    %367 = vmatprep.mubr.f32.mxu0 0.0
    %368 = vmatmul.mubr.f32.gmra.mrb[0].mxu0 %v150
    %v369 = vpop.f32.mrb[0].mxu0
    %v370 = vadd.f32 %v59, %v369
    %v371 = vpop.f32.mrb[0].mxu0
    %372 = vmatprep.mubr.f32.mxu0 0.0
    %373 = vmatmul.mubr.f32.gmra.mrb[0].mxu0 %v153
    %v374 = vpop.f32.mrb[0].mxu0
    %v375 = vadd.f32 %v59, %v374
    %v376 = vpop.f32.mrb[0].mxu0
    %377 = vmatprep.mubr.f32.mxu0 0.0
    %378 = vmatmul.mubr.f32.gmra.mrb[0].mxu0 %v156
    %v379 = vpop.f32.mrb[0].mxu0
    %v380 = vadd.f32 %v59, %v379
    %v381 = vpop.f32.mrb[0].mxu0
    %382 = vdwg.mxu0
    %v383 = vmax.f32 %v225, 0.0
    %v384 = vmax.f32 %v230, 0.0
    %v385 = vmax.f32 %v235, 0.0
    %v386 = vmax.f32 %v240, 0.0
    %v387 = vmax.f32 %v245, 0.0
    %v388 = vmax.f32 %v250, 0.0
    %v389 = vmax.f32 %v255, 0.0
    %v390 = vmax.f32 %v260, 0.0
    %v391 = vmax.f32 %v265, 0.0
    %v392 = vmax.f32 %v270, 0.0
    %v393 = vmax.f32 %v275, 0.0
    %v394 = vmax.f32 %v280, 0.0
    %v395 = vmax.f32 %v285, 0.0
    %v396 = vmax.f32 %v290, 0.0
    %v397 = vmax.f32 %v295, 0.0
    %v398 = vmax.f32 %v300, 0.0
    %v399 = vmax.f32 %v305, 0.0
    %v400 = vmax.f32 %v310, 0.0
    %v401 = vmax.f32 %v315, 0.0
    %v402 = vmax.f32 %v320, 0.0
    %v403 = vmax.f32 %v325, 0.0
    %v404 = vmax.f32 %v330, 0.0
    %v405 = vmax.f32 %v335, 0.0
    %v406 = vmax.f32 %v340, 0.0
    %v407 = vmax.f32 %v345, 0.0
    %v408 = vmax.f32 %v350, 0.0
    %v409 = vmax.f32 %v355, 0.0
    %v410 = vmax.f32 %v360, 0.0
    %v411 = vmax.f32 %v365, 0.0
    %v412 = vmax.f32 %v370, 0.0
    %v413 = vmax.f32 %v375, 0.0
    %v414 = vmax.f32 %v380, 0.0
    %v415 = vld [vmem:[%s3] sm:$0xff]
    %v416 = vld [vmem:[%s3 + $0x8] sm:$0xff]
    %v417 = vld [vmem:[%s3 + $0x10] sm:$0xff]
    %v418 = vld [vmem:[%s3 + $0x18] sm:$0xff]
    %v419 = vld [vmem:[%s3 + $0x20] sm:$0xff]
    %v420 = vld [vmem:[%s3 + $0x28] sm:$0xff]
    %v421 = vld [vmem:[%s3 + $0x30] sm:$0xff]
    %v422 = vld [vmem:[%s3 + $0x38] sm:$0xff]
    %v423 = vld [vmem:[%s3 + $0x40] sm:$0xff]
    %v424 = vld [vmem:[%s3 + $0x48] sm:$0xff]
    %v425 = vld [vmem:[%s3 + $0x50] sm:$0xff]
    %v426 = vld [vmem:[%s3 + $0x58] sm:$0xff]
    %v427 = vld [vmem:[%s3 + $0x60] sm:$0xff]
    %v428 = vld [vmem:[%s3 + $0x68] sm:$0xff]
    %v429 = vld [vmem:[%s3 + $0x70] sm:$0xff]
    %v430 = vld [vmem:[%s3 + $0x78] sm:$0xff]
    %v431 = vld [vmem:[%s4] sm:$0x1]
    %v433 = vlaneseq
    %v434 = vshrl.u32 %v433, 7
    %v435 = vsub.s32 0, %v434
    %v436 = vrot.slane %v431, %v435
    %438 = vmatprep.subr.mxu0 0.0
    %439 = vmatpush1.msra.mxu0 %v415
    %440 = vmatprep.subr.mxu0 0.0
    %441 = vmatpush1.msra.mxu0 %v416
    %442 = vmatprep.subr.mxu0 0.0
    %443 = vmatpush1.msra.mxu0 %v417
    %444 = vmatprep.subr.mxu0 0.0
    %445 = vmatpush1.msra.mxu0 %v418
    %446 = vmatprep.subr.mxu0 0.0
    %447 = vmatpush1.msra.mxu0 %v419
    %448 = vmatprep.subr.mxu0 0.0
    %449 = vmatpush1.msra.mxu0 %v420
    %450 = vmatprep.subr.mxu0 0.0
    %451 = vmatpush1.msra.mxu0 %v421
    %452 = vmatprep.subr.mxu0 0.0
    %453 = vmatpush1.msra.mxu0 %v422
    %454 = vmatprep.subr.mxu0 0.0
    %455 = vmatpush1.msra.mxu0 %v423
    %456 = vmatprep.subr.mxu0 0.0
    %457 = vmatpush1.msra.mxu0 %v424
    %458 = vmatprep.subr.mxu0 0.0
    %459 = vmatpush1.msra.mxu0 %v425
    %460 = vmatprep.subr.mxu0 0.0
    %461 = vmatpush1.msra.mxu0 %v426
    %462 = vmatprep.subr.mxu0 0.0
    %463 = vmatpush1.msra.mxu0 %v427
    %464 = vmatprep.subr.mxu0 0.0
    %465 = vmatpush1.msra.mxu0 %v428
    %466 = vmatprep.subr.mxu0 0.0
    %467 = vmatpush1.msra.mxu0 %v429
    %468 = vmatprep.subr.mxu0 0.0
    %469 = vmatpush1.msra.mxu0 %v430
    %470 = vmatprep.subr.mxu0 0.0
    %471 = vmatpush1.msra.mxu0 0.0
    %472 = vmatprep.subr.mxu0 0.0
    %473 = vmatpush1.msra.mxu0 0.0
    %474 = vmatprep.subr.mxu0 0.0
    %475 = vmatpush1.msra.mxu0 0.0
    %476 = vmatprep.subr.mxu0 0.0
    %477 = vmatpush1.msra.mxu0 0.0
    %478 = vmatprep.subr.mxu0 0.0
    %479 = vmatpush1.msra.mxu0 0.0
    %480 = vmatprep.subr.mxu0 0.0
    %481 = vmatpush1.msra.mxu0 0.0
    %482 = vmatprep.subr.mxu0 0.0
    %483 = vmatpush1.msra.mxu0 0.0
    %484 = vmatprep.subr.mxu0 0.0
    %485 = vmatpush1.msra.mxu0 0.0
    %486 = vmatprep.subr.mxu0 0.0
    %487 = vmatpush1.msra.mxu0 0.0
    %488 = vmatprep.subr.mxu0 0.0
    %489 = vmatpush1.msra.mxu0 0.0
    %490 = vmatprep.subr.mxu0 0.0
    %491 = vmatpush1.msra.mxu0 0.0
    %492 = vmatprep.subr.mxu0 0.0
    %493 = vmatpush1.msra.mxu0 0.0
    %494 = vmatprep.subr.mxu0 0.0
    %495 = vmatpush1.msra.mxu0 0.0
    %496 = vmatprep.subr.mxu0 0.0
    %497 = vmatpush1.msra.mxu0 0.0
    %498 = vmatprep.subr.mxu0 0.0
    %499 = vmatpush1.msra.mxu0 0.0
    %500 = vmatprep.subr.mxu0 0.0
    %501 = vmatpush1.msra.mxu0 0.0
    %502 = vmatprep.mubr.f32.mxu0 0.0
    %503 = vmatmul.mubr.f32.gmra.mrb[0].mxu0 %v383
    %v504 = vpop.f32.mrb[0].mxu0
    %v505 = vadd.f32 %v436, %v504
    %v506 = vpop.f32.mrb[0].mxu0
    %507 = vmatprep.mubr.f32.mxu0 0.0
    %508 = vmatmul.mubr.f32.gmra.mrb[0].mxu0 %v384
    %v509 = vpop.f32.mrb[0].mxu0
    %v510 = vadd.f32 %v436, %v509
    %v511 = vpop.f32.mrb[0].mxu0
    %512 = vmatprep.mubr.f32.mxu0 0.0
    %513 = vmatmul.mubr.f32.gmra.mrb[0].mxu0 %v385
    %v514 = vpop.f32.mrb[0].mxu0
    %v515 = vadd.f32 %v436, %v514
    %v516 = vpop.f32.mrb[0].mxu0
    %517 = vmatprep.mubr.f32.mxu0 0.0
    %518 = vmatmul.mubr.f32.gmra.mrb[0].mxu0 %v386
    %v519 = vpop.f32.mrb[0].mxu0
    %v520 = vadd.f32 %v436, %v519
    %v521 = vpop.f32.mrb[0].mxu0
    %522 = vmatprep.mubr.f32.mxu0 0.0
    %523 = vmatmul.mubr.f32.gmra.mrb[0].mxu0 %v387
    %v524 = vpop.f32.mrb[0].mxu0
    %v525 = vadd.f32 %v436, %v524
    %v526 = vpop.f32.mrb[0].mxu0
    %527 = vmatprep.mubr.f32.mxu0 0.0
    %528 = vmatmul.mubr.f32.gmra.mrb[0].mxu0 %v388
    %v529 = vpop.f32.mrb[0].mxu0
    %v530 = vadd.f32 %v436, %v529
    %v531 = vpop.f32.mrb[0].mxu0
    %532 = vmatprep.mubr.f32.mxu0 0.0
    %533 = vmatmul.mubr.f32.gmra.mrb[0].mxu0 %v389
    %v534 = vpop.f32.mrb[0].mxu0
    %v535 = vadd.f32 %v436, %v534
    %v536 = vpop.f32.mrb[0].mxu0
    %537 = vmatprep.mubr.f32.mxu0 0.0
    %538 = vmatmul.mubr.f32.gmra.mrb[0].mxu0 %v390
    %v539 = vpop.f32.mrb[0].mxu0
    %v540 = vadd.f32 %v436, %v539
    %v541 = vpop.f32.mrb[0].mxu0
    %542 = vmatprep.mubr.f32.mxu0 0.0
    %543 = vmatmul.mubr.f32.gmra.mrb[0].mxu0 %v391
    %v544 = vpop.f32.mrb[0].mxu0
    %v545 = vadd.f32 %v436, %v544
    %v546 = vpop.f32.mrb[0].mxu0
    %547 = vmatprep.mubr.f32.mxu0 0.0
    %548 = vmatmul.mubr.f32.gmra.mrb[0].mxu0 %v392
    %v549 = vpop.f32.mrb[0].mxu0
    %v550 = vadd.f32 %v436, %v549
    %v551 = vpop.f32.mrb[0].mxu0
    %552 = vmatprep.mubr.f32.mxu0 0.0
    %553 = vmatmul.mubr.f32.gmra.mrb[0].mxu0 %v393
    %v554 = vpop.f32.mrb[0].mxu0
    %v555 = vadd.f32 %v436, %v554
    %v556 = vpop.f32.mrb[0].mxu0
    %557 = vmatprep.mubr.f32.mxu0 0.0
    %558 = vmatmul.mubr.f32.gmra.mrb[0].mxu0 %v394
    %v559 = vpop.f32.mrb[0].mxu0
    %v560 = vadd.f32 %v436, %v559
    %v561 = vpop.f32.mrb[0].mxu0
    %562 = vmatprep.mubr.f32.mxu0 0.0
    %563 = vmatmul.mubr.f32.gmra.mrb[0].mxu0 %v395
    %v564 = vpop.f32.mrb[0].mxu0
    %v565 = vadd.f32 %v436, %v564
    %v566 = vpop.f32.mrb[0].mxu0
    %567 = vmatprep.mubr.f32.mxu0 0.0
    %568 = vmatmul.mubr.f32.gmra.mrb[0].mxu0 %v396
    %v569 = vpop.f32.mrb[0].mxu0
    %v570 = vadd.f32 %v436, %v569
    %v571 = vpop.f32.mrb[0].mxu0
    %572 = vmatprep.mubr.f32.mxu0 0.0
    %573 = vmatmul.mubr.f32.gmra.mrb[0].mxu0 %v397
    %v574 = vpop.f32.mrb[0].mxu0
    %v575 = vadd.f32 %v436, %v574
    %v576 = vpop.f32.mrb[0].mxu0
    %577 = vmatprep.mubr.f32.mxu0 0.0
    %578 = vmatmul.mubr.f32.gmra.mrb[0].mxu0 %v398
    %v579 = vpop.f32.mrb[0].mxu0
    %v580 = vadd.f32 %v436, %v579
    %v581 = vpop.f32.mrb[0].mxu0
    %582 = vmatprep.mubr.f32.mxu0 0.0
    %583 = vmatmul.mubr.f32.gmra.mrb[0].mxu0 %v399
    %v584 = vpop.f32.mrb[0].mxu0
    %v585 = vadd.f32 %v436, %v584
    %v586 = vpop.f32.mrb[0].mxu0
    %587 = vmatprep.mubr.f32.mxu0 0.0
    %588 = vmatmul.mubr.f32.gmra.mrb[0].mxu0 %v400
    %v589 = vpop.f32.mrb[0].mxu0
    %v590 = vadd.f32 %v436, %v589
    %v591 = vpop.f32.mrb[0].mxu0
    %592 = vmatprep.mubr.f32.mxu0 0.0
    %593 = vmatmul.mubr.f32.gmra.mrb[0].mxu0 %v401
    %v594 = vpop.f32.mrb[0].mxu0
    %v595 = vadd.f32 %v436, %v594
    %v596 = vpop.f32.mrb[0].mxu0
    %597 = vmatprep.mubr.f32.mxu0 0.0
    %598 = vmatmul.mubr.f32.gmra.mrb[0].mxu0 %v402
    %v599 = vpop.f32.mrb[0].mxu0
    %v600 = vadd.f32 %v436, %v599
    %v601 = vpop.f32.mrb[0].mxu0
    %602 = vmatprep.mubr.f32.mxu0 0.0
    %603 = vmatmul.mubr.f32.gmra.mrb[0].mxu0 %v403
    %v604 = vpop.f32.mrb[0].mxu0
    %v605 = vadd.f32 %v436, %v604
    %v606 = vpop.f32.mrb[0].mxu0
    %607 = vmatprep.mubr.f32.mxu0 0.0
    %608 = vmatmul.mubr.f32.gmra.mrb[0].mxu0 %v404
    %v609 = vpop.f32.mrb[0].mxu0
    %v610 = vadd.f32 %v436, %v609
    %v611 = vpop.f32.mrb[0].mxu0
    %612 = vmatprep.mubr.f32.mxu0 0.0
    %613 = vmatmul.mubr.f32.gmra.mrb[0].mxu0 %v405
    %v614 = vpop.f32.mrb[0].mxu0
    %v615 = vadd.f32 %v436, %v614
    %v616 = vpop.f32.mrb[0].mxu0
    %617 = vmatprep.mubr.f32.mxu0 0.0
    %618 = vmatmul.mubr.f32.gmra.mrb[0].mxu0 %v406
    %v619 = vpop.f32.mrb[0].mxu0
    %v620 = vadd.f32 %v436, %v619
    %v621 = vpop.f32.mrb[0].mxu0
    %622 = vmatprep.mubr.f32.mxu0 0.0
    %623 = vmatmul.mubr.f32.gmra.mrb[0].mxu0 %v407
    %v624 = vpop.f32.mrb[0].mxu0
    %v625 = vadd.f32 %v436, %v624
    %v626 = vpop.f32.mrb[0].mxu0
    %627 = vmatprep.mubr.f32.mxu0 0.0
    %628 = vmatmul.mubr.f32.gmra.mrb[0].mxu0 %v408
    %v629 = vpop.f32.mrb[0].mxu0
    %v630 = vadd.f32 %v436, %v629
    %v631 = vpop.f32.mrb[0].mxu0
    %632 = vmatprep.mubr.f32.mxu0 0.0
    %633 = vmatmul.mubr.f32.gmra.mrb[0].mxu0 %v409
    %v634 = vpop.f32.mrb[0].mxu0
    %v635 = vadd.f32 %v436, %v634
    %v636 = vpop.f32.mrb[0].mxu0
    %637 = vmatprep.mubr.f32.mxu0 0.0
    %638 = vmatmul.mubr.f32.gmra.mrb[0].mxu0 %v410
    %v639 = vpop.f32.mrb[0].mxu0
    %v640 = vadd.f32 %v436, %v639
    %v641 = vpop.f32.mrb[0].mxu0
    %642 = vmatprep.mubr.f32.mxu0 0.0
    %643 = vmatmul.mubr.f32.gmra.mrb[0].mxu0 %v411
    %v644 = vpop.f32.mrb[0].mxu0
    %v645 = vadd.f32 %v436, %v644
    %v646 = vpop.f32.mrb[0].mxu0
    %647 = vmatprep.mubr.f32.mxu0 0.0
    %648 = vmatmul.mubr.f32.gmra.mrb[0].mxu0 %v412
    %v649 = vpop.f32.mrb[0].mxu0
    %v650 = vadd.f32 %v436, %v649
    %v651 = vpop.f32.mrb[0].mxu0
    %652 = vmatprep.mubr.f32.mxu0 0.0
    %653 = vmatmul.mubr.f32.gmra.mrb[0].mxu0 %v413
    %v654 = vpop.f32.mrb[0].mxu0
    %v655 = vadd.f32 %v436, %v654
    %v656 = vpop.f32.mrb[0].mxu0
    %657 = vmatprep.mubr.f32.mxu0 0.0
    %658 = vmatmul.mubr.f32.gmra.mrb[0].mxu0 %v414
    %v659 = vpop.f32.mrb[0].mxu0
    %v660 = vadd.f32 %v436, %v659
    %v661 = vpop.f32.mrb[0].mxu0
    %662 = vdwg.mxu0
    %v663 = vmax.f32 %v505, 0.0
    %v664 = vmax.f32 %v510, 0.0
    %v665 = vmax.f32 %v515, 0.0
    %v666 = vmax.f32 %v520, 0.0
    %v667 = vmax.f32 %v525, 0.0
    %v668 = vmax.f32 %v530, 0.0
    %v669 = vmax.f32 %v535, 0.0
    %v670 = vmax.f32 %v540, 0.0
    %v671 = vmax.f32 %v545, 0.0
    %v672 = vmax.f32 %v550, 0.0
    %v673 = vmax.f32 %v555, 0.0
    %v674 = vmax.f32 %v560, 0.0
    %v675 = vmax.f32 %v565, 0.0
    %v676 = vmax.f32 %v570, 0.0
    %v677 = vmax.f32 %v575, 0.0
    %v678 = vmax.f32 %v580, 0.0
    %v679 = vmax.f32 %v585, 0.0
    %v680 = vmax.f32 %v590, 0.0
    %v681 = vmax.f32 %v595, 0.0
    %v682 = vmax.f32 %v600, 0.0
    %v683 = vmax.f32 %v605, 0.0
    %v684 = vmax.f32 %v610, 0.0
    %v685 = vmax.f32 %v615, 0.0
    %v686 = vmax.f32 %v620, 0.0
    %v687 = vmax.f32 %v625, 0.0
    %v688 = vmax.f32 %v630, 0.0
    %v689 = vmax.f32 %v635, 0.0
    %v690 = vmax.f32 %v640, 0.0
    %v691 = vmax.f32 %v645, 0.0
    %v692 = vmax.f32 %v650, 0.0
    %v693 = vmax.f32 %v655, 0.0
    %v694 = vmax.f32 %v660, 0.0
    %v695 = vrot.slane %v663, 4
    %v696 = vmax.f32 %v663, %v695
    %v697 = vrot.slane %v696, 2
    %v698 = vmax.f32 %v696, %v697
    %v699 = vrot.slane %v698, 1
    %v700 = vmax.f32 %v698, %v699
    %v701 = vrot.slane %v664, 4
    %v702 = vmax.f32 %v664, %v701
    %v703 = vrot.slane %v702, 2
    %v704 = vmax.f32 %v702, %v703
    %v705 = vrot.slane %v704, 1
    %v706 = vmax.f32 %v704, %v705
    %v707 = vrot.slane %v665, 4
    %v708 = vmax.f32 %v665, %v707
    %v709 = vrot.slane %v708, 2
    %v710 = vmax.f32 %v708, %v709
    %v711 = vrot.slane %v710, 1
    %v712 = vmax.f32 %v710, %v711
    %v713 = vrot.slane %v666, 4
    %v714 = vmax.f32 %v666, %v713
    %v715 = vrot.slane %v714, 2
    %v716 = vmax.f32 %v714, %v715
    %v717 = vrot.slane %v716, 1
    %v718 = vmax.f32 %v716, %v717
    %v719 = vrot.slane %v667, 4
    %v720 = vmax.f32 %v667, %v719
    %v721 = vrot.slane %v720, 2
    %v722 = vmax.f32 %v720, %v721
    %v723 = vrot.slane %v722, 1
    %v724 = vmax.f32 %v722, %v723
    %v725 = vrot.slane %v668, 4
    %v726 = vmax.f32 %v668, %v725
    %v727 = vrot.slane %v726, 2
    %v728 = vmax.f32 %v726, %v727
    %v729 = vrot.slane %v728, 1
    %v730 = vmax.f32 %v728, %v729
    %v731 = vrot.slane %v669, 4
    %v732 = vmax.f32 %v669, %v731
    %v733 = vrot.slane %v732, 2
    %v734 = vmax.f32 %v732, %v733
    %v735 = vrot.slane %v734, 1
    %v736 = vmax.f32 %v734, %v735
    %v737 = vrot.slane %v670, 4
    %v738 = vmax.f32 %v670, %v737
    %v739 = vrot.slane %v738, 2
    %v740 = vmax.f32 %v738, %v739
    %v741 = vrot.slane %v740, 1
    %v742 = vmax.f32 %v740, %v741
    %v743 = vrot.slane %v671, 4
    %v744 = vmax.f32 %v671, %v743
    %v745 = vrot.slane %v744, 2
    %v746 = vmax.f32 %v744, %v745
    %v747 = vrot.slane %v746, 1
    %v748 = vmax.f32 %v746, %v747
    %v749 = vrot.slane %v672, 4
    %v750 = vmax.f32 %v672, %v749
    %v751 = vrot.slane %v750, 2
    %v752 = vmax.f32 %v750, %v751
    %v753 = vrot.slane %v752, 1
    %v754 = vmax.f32 %v752, %v753
    %v755 = vrot.slane %v673, 4
    %v756 = vmax.f32 %v673, %v755
    %v757 = vrot.slane %v756, 2
    %v758 = vmax.f32 %v756, %v757
    %v759 = vrot.slane %v758, 1
    %v760 = vmax.f32 %v758, %v759
    %v761 = vrot.slane %v674, 4
    %v762 = vmax.f32 %v674, %v761
    %v763 = vrot.slane %v762, 2
    %v764 = vmax.f32 %v762, %v763
    %v765 = vrot.slane %v764, 1
    %v766 = vmax.f32 %v764, %v765
    %v767 = vrot.slane %v675, 4
    %v768 = vmax.f32 %v675, %v767
    %v769 = vrot.slane %v768, 2
    %v770 = vmax.f32 %v768, %v769
    %v771 = vrot.slane %v770, 1
    %v772 = vmax.f32 %v770, %v771
    %v773 = vrot.slane %v676, 4
    %v774 = vmax.f32 %v676, %v773
    %v775 = vrot.slane %v774, 2
    %v776 = vmax.f32 %v774, %v775
    %v777 = vrot.slane %v776, 1
    %v778 = vmax.f32 %v776, %v777
    %v779 = vrot.slane %v677, 4
    %v780 = vmax.f32 %v677, %v779
    %v781 = vrot.slane %v780, 2
    %v782 = vmax.f32 %v780, %v781
    %v783 = vrot.slane %v782, 1
    %v784 = vmax.f32 %v782, %v783
    %v785 = vrot.slane %v678, 4
    %v786 = vmax.f32 %v678, %v785
    %v787 = vrot.slane %v786, 2
    %v788 = vmax.f32 %v786, %v787
    %v789 = vrot.slane %v788, 1
    %v790 = vmax.f32 %v788, %v789
    %v791 = vrot.slane %v679, 4
    %v792 = vmax.f32 %v679, %v791
    %v793 = vrot.slane %v792, 2
    %v794 = vmax.f32 %v792, %v793
    %v795 = vrot.slane %v794, 1
    %v796 = vmax.f32 %v794, %v795
    %v797 = vrot.slane %v680, 4
    %v798 = vmax.f32 %v680, %v797
    %v799 = vrot.slane %v798, 2
    %v800 = vmax.f32 %v798, %v799
    %v801 = vrot.slane %v800, 1
    %v802 = vmax.f32 %v800, %v801
    %v803 = vrot.slane %v681, 4
    %v804 = vmax.f32 %v681, %v803
    %v805 = vrot.slane %v804, 2
    %v806 = vmax.f32 %v804, %v805
    %v807 = vrot.slane %v806, 1
    %v808 = vmax.f32 %v806, %v807
    %v809 = vrot.slane %v682, 4
    %v810 = vmax.f32 %v682, %v809
    %v811 = vrot.slane %v810, 2
    %v812 = vmax.f32 %v810, %v811
    %v813 = vrot.slane %v812, 1
    %v814 = vmax.f32 %v812, %v813
    %v815 = vrot.slane %v683, 4
    %v816 = vmax.f32 %v683, %v815
    %v817 = vrot.slane %v816, 2
    %v818 = vmax.f32 %v816, %v817
    %v819 = vrot.slane %v818, 1
    %v820 = vmax.f32 %v818, %v819
    %v821 = vrot.slane %v684, 4
    %v822 = vmax.f32 %v684, %v821
    %v823 = vrot.slane %v822, 2
    %v824 = vmax.f32 %v822, %v823
    %v825 = vrot.slane %v824, 1
    %v826 = vmax.f32 %v824, %v825
    %v827 = vrot.slane %v685, 4
    %v828 = vmax.f32 %v685, %v827
    %v829 = vrot.slane %v828, 2
    %v830 = vmax.f32 %v828, %v829
    %v831 = vrot.slane %v830, 1
    %v832 = vmax.f32 %v830, %v831
    %v833 = vrot.slane %v686, 4
    %v834 = vmax.f32 %v686, %v833
    %v835 = vrot.slane %v834, 2
    %v836 = vmax.f32 %v834, %v835
    %v837 = vrot.slane %v836, 1
    %v838 = vmax.f32 %v836, %v837
    %v839 = vrot.slane %v687, 4
    %v840 = vmax.f32 %v687, %v839
    %v841 = vrot.slane %v840, 2
    %v842 = vmax.f32 %v840, %v841
    %v843 = vrot.slane %v842, 1
    %v844 = vmax.f32 %v842, %v843
    %v845 = vrot.slane %v688, 4
    %v846 = vmax.f32 %v688, %v845
    %v847 = vrot.slane %v846, 2
    %v848 = vmax.f32 %v846, %v847
    %v849 = vrot.slane %v848, 1
    %v850 = vmax.f32 %v848, %v849
    %v851 = vrot.slane %v689, 4
    %v852 = vmax.f32 %v689, %v851
    %v853 = vrot.slane %v852, 2
    %v854 = vmax.f32 %v852, %v853
    %v855 = vrot.slane %v854, 1
    %v856 = vmax.f32 %v854, %v855
    %v857 = vrot.slane %v690, 4
    %v858 = vmax.f32 %v690, %v857
    %v859 = vrot.slane %v858, 2
    %v860 = vmax.f32 %v858, %v859
    %v861 = vrot.slane %v860, 1
    %v862 = vmax.f32 %v860, %v861
    %v863 = vrot.slane %v691, 4
    %v864 = vmax.f32 %v691, %v863
    %v865 = vrot.slane %v864, 2
    %v866 = vmax.f32 %v864, %v865
    %v867 = vrot.slane %v866, 1
    %v868 = vmax.f32 %v866, %v867
    %v869 = vrot.slane %v692, 4
    %v870 = vmax.f32 %v692, %v869
    %v871 = vrot.slane %v870, 2
    %v872 = vmax.f32 %v870, %v871
    %v873 = vrot.slane %v872, 1
    %v874 = vmax.f32 %v872, %v873
    %v875 = vrot.slane %v693, 4
    %v876 = vmax.f32 %v693, %v875
    %v877 = vrot.slane %v876, 2
    %v878 = vmax.f32 %v876, %v877
    %v879 = vrot.slane %v878, 1
    %v880 = vmax.f32 %v878, %v879
    %v881 = vrot.slane %v694, 4
    %v882 = vmax.f32 %v694, %v881
    %v883 = vrot.slane %v882, 2
    %v884 = vmax.f32 %v882, %v883
    %v885 = vrot.slane %v884, 1
    %v886 = vmax.f32 %v884, %v885
    %vm919 = vcmask 1041409
    %v920 = vsel %vm919, %v706, %v700
    %vm921 = vcmask 1042434
    %v922 = vsel %vm921, %v712, %v920
    %vm923 = vcmask 1043459
    %v924 = vsel %vm923, %v718, %v922
    %vm925 = vcmask 1044484
    %v926 = vsel %vm925, %v724, %v924
    %vm927 = vcmask 1045509
    %v928 = vsel %vm927, %v730, %v926
    %vm929 = vcmask 1046534
    %v930 = vsel %vm929, %v736, %v928
    %vm931 = vcmask 1047559
    %v932 = vsel %vm931, %v742, %v930
    %v933 = vsel %vm919, %v754, %v748
    %v934 = vsel %vm921, %v760, %v933
    %v935 = vsel %vm923, %v766, %v934
    %v936 = vsel %vm925, %v772, %v935
    %v937 = vsel %vm927, %v778, %v936
    %v938 = vsel %vm929, %v784, %v937
    %v939 = vsel %vm931, %v790, %v938
    %v940 = vsel %vm919, %v802, %v796
    %v941 = vsel %vm921, %v808, %v940
    %v942 = vsel %vm923, %v814, %v941
    %v943 = vsel %vm925, %v820, %v942
    %v944 = vsel %vm927, %v826, %v943
    %v945 = vsel %vm929, %v832, %v944
    %v946 = vsel %vm931, %v838, %v945
    %v947 = vsel %vm919, %v850, %v844
    %v948 = vsel %vm921, %v856, %v947
    %v949 = vsel %vm923, %v862, %v948
    %v950 = vsel %vm925, %v868, %v949
    %v951 = vsel %vm927, %v874, %v950
    %v952 = vsel %vm929, %v880, %v951
    %v953 = vsel %vm931, %v886, %v952
    %958 = vst [vmem:[#allocation2] sm:$0xff] %v932
    %959 = vst [vmem:[#allocation2 + $0x8] sm:$0xff] %v939
    %960 = vst [vmem:[#allocation2 + $0x10] sm:$0xff] %v946
    %961 = vst [vmem:[#allocation2 + $0x18] sm:$0xff] %v953
    // Predicated region
    $region22: #{tpu_custom_call.1} parent=1 // pred_check
      _
    $region23: #{tpu_custom_call.1} parent=1 // pred_check_branch
      %963 = sbr.rel (0) target = $region25
    $region24: #{tpu_custom_call.1} parent=1 // pred_region
      %s965 = ssub.s32 512, 512
      %966 = vsyncadd [#allocation3], %s965
      %s967 = sshll.u32 [#allocation2], 4
      %s968 = int_to_ptr.vmem [resolvable:$true] %s967
      %973 = dma.vmem_to_hbm [thread:$0]  %s968, 512, %s5, [#allocation3], 128, 128, 8
    $region25: #{tpu_custom_call.1} parent=1 // pred_fallthru
      _
    // Predicated region
    $region26: #{tpu_custom_call.1} parent=1 // pred_check
      _
    $region27: #{tpu_custom_call.1} parent=1 // pred_check_branch
      %975 = sbr.rel (0) target = $region29
    $region28: #{tpu_custom_call.1} parent=1 // pred_region
      %976 = dma.done [#allocation3], 512
    $region29: #{tpu_custom_call.1} parent=1 // pred_fallthru
      _
    %977 = vsyncpa [#allocation3], 1

</llo_original>
